<compile_context>
chip_gen: v5e
topology: v5e:2x2
jax: 0.10.0
libtpu: 0.0.40
codegen_flags: <defaults>
</compile_context>

<pallas_src>
import jax
import jax.numpy as jnp
from jax.experimental import pallas as pl
from jax.experimental.pallas import tpu as pltpu


def _stgcn_kernel(adj_ref, nodes_ref, w_ref, out_ref):
    # adj_ref:   (1, tm, N)  row tile of this batch's adjacency matrix
    # nodes_ref: (1, N,  F)  this batch's node features (full contraction dim)
    # w_ref:     (F, F)      shared learned weight matrix (grid-resident)
    # out_ref:   (1, tm, F)  row tile of the output
    adj = adj_ref[0]        # (tm, N)
    nodes = nodes_ref[0]    # (N, F)
    w = w_ref[...]          # (F, F)

    # Both matmuls on the MXU with f32 accumulation. K dims (N and F) are short,
    # so the tall LHS (tm rows) is what keeps the MXU occupied.
    weighted = jnp.dot(adj, nodes, preferred_element_type=jnp.float32)   # (tm, F) f32
    h = jnp.dot(weighted, w, preferred_element_type=jnp.float32)         # (tm, F) f32

    # ReLU in f32, then downcast to the output dtype.
    out_ref[0] = jnp.maximum(h, 0.0).astype(out_ref.dtype)


def _choose_row_tile(N, F, itemsize, vmem_budget_bytes=12 << 20):
    """Pick tm (adjacency rows per grid step) so the double-buffered working
    set fits comfortably under the scoped-VMEM default of v5e/v6e/v7x."""

    def step_bytes(tm):
        # 2x for the pipeline double buffers on adj tile, nodes and out tile;
        # the weight is grid-invariant (constant index_map) and counted once.
        return (2 * (tm * N + N * F + tm * F) + F * F) * itemsize

    tm = min(N, 256)
    if tm != N:
        tm = max(8, (tm // 8) * 8)  # keep the sublane dim a multiple of 8
    while tm > 8 and step_bytes(tm) > vmem_budget_bytes:
        tm = max(8, tm // 2)
    return tm


def stgcn_forward(node_list, adj_matrix, weight_matrix):
    """relu((adj @ nodes) @ W), batched over the leading dim."""
    B, N, F = node_list.shape
    assert adj_matrix.shape == (B, N, N)
    assert weight_matrix.shape == (F, F)

    out_dtype = node_list.dtype
    in_itemsize = jnp.dtype(node_list.dtype).itemsize
    out_itemsize = jnp.dtype(out_dtype).itemsize

    tm = _choose_row_tile(N, F, in_itemsize)
    grid = (B, pl.cdiv(N, tm))

    cost = pl.CostEstimate(
        flops=2 * B * N * N * F + 2 * B * N * F * F,
        transcendentals=0,
        bytes_accessed=(B * N * N + B * N * F + F * F) * in_itemsize
        + B * N * F * out_itemsize,
    )

    return pl.pallas_call(
        _stgcn_kernel,
        out_shape=jax.ShapeDtypeStruct((B, N, F), out_dtype),
        grid_spec=pltpu.PrefetchScalarGridSpec(
            num_scalar_prefetch=0,
            grid=grid,
            in_specs=[
                # Row tile of this batch's adjacency matrix.
                pl.BlockSpec((1, tm, N), lambda b, i: (b, i, 0)),
                # Whole node-feature matrix of this batch (contraction dim whole).
                pl.BlockSpec((1, N, F), lambda b, i: (b, 0, 0)),
                # Shared weight: constant index_map -> stays resident, no re-DMA.
                pl.BlockSpec((F, F), lambda b, i: (0, 0)),
            ],
            out_specs=pl.BlockSpec((1, tm, F), lambda b, i: (b, i, 0)),
        ),
        compiler_params=pltpu.CompilerParams(
            # Both grid axes are independent -> shard across v7x's 2 TensorCores.
            dimension_semantics=("parallel", "parallel"),
        ),
        cost_estimate=cost,
    )(adj_matrix, node_list, weight_matrix)


if __name__ == "__main__":
    # Small shapes consistent with the module:
    #   n_fapp = 16, n_fpos = 16  ->  feature_size F = 32
    #   B = 2 batches, N = 16 spatio-temporal graph nodes
    B, N, F = 2, 16, 32

    key = jax.random.PRNGKey(0)
    k_nodes, k_adj, k_w = jax.random.split(key, 3)

    node_list = jax.random.normal(k_nodes, (B, N, F), dtype=jnp.float32)
    adj_matrix = jax.random.normal(k_adj, (B, N, N), dtype=jnp.float32)
    # Deterministic stand-in for the module's torch.randn((F, F)) weight_matrix.
    weight_matrix = jax.random.normal(k_w, (F, F), dtype=jnp.float32)

    out = stgcn_forward(node_list, adj_matrix, weight_matrix)
    out = jax.block_until_ready(out)

    # Pure-JAX reference for sanity.
    ref = jnp.maximum(
        jnp.matmul(jnp.matmul(adj_matrix, node_list), weight_matrix), 0.0
    )
    assert out.shape == (B, N, F)
    assert jnp.allclose(out, ref, atol=1e-4, rtol=1e-4)

    print("KERNEL_OK")
</pallas_src>

<mosaic_0001>
module attributes {stable_mosaic.version = 11 : i64} {
  func.func @_stgcn_kernel(%arg0: i32, %arg1: i32, %arg2: memref<1x16x16xf32, #tpu.memory_space<vmem>>, %arg3: memref<1x16x32xf32, #tpu.memory_space<vmem>>, %arg4: memref<32x32xf32, #tpu.memory_space<vmem>>, %arg5: memref<1x16x32xf32, #tpu.memory_space<vmem>>) attributes {dimension_semantics = [#tpu.dimension_semantics<parallel>, #tpu.dimension_semantics<parallel>], iteration_bounds = array<i64: 2, 1>, scalar_prefetch = 0 : i64, scratch_operands = 0 : i64, tpu.core_type = #tpu.core_type<tc>, window_params = [{transform_indices = @transform_0, window_bounds = array<i64: 1, 16, 16>}, {transform_indices = @transform_1, window_bounds = array<i64: 1, 16, 32>}, {pipeline_mode = #tpu.pipeline_mode<synchronous>, transform_indices = @transform_2, window_bounds = array<i64: 32, 32>}, {transform_indices = @transform_3, window_bounds = array<i64: 1, 16, 32>}]} {
    %c0 = arith.constant 0 : index
    %c0_0 = arith.constant 0 : index
    %c0_1 = arith.constant 0 : index
    %0 = vector.load %arg2[%c0, %c0_0, %c0_1] : memref<1x16x16xf32, #tpu.memory_space<vmem>>, vector<1x16x16xf32>
    %1 = vector.shape_cast %0 : vector<1x16x16xf32> to vector<16x16xf32>
    %c0_2 = arith.constant 0 : index
    %c0_3 = arith.constant 0 : index
    %c0_4 = arith.constant 0 : index
    %2 = vector.load %arg3[%c0_2, %c0_3, %c0_4] : memref<1x16x32xf32, #tpu.memory_space<vmem>>, vector<1x16x32xf32>
    %3 = vector.shape_cast %2 : vector<1x16x32xf32> to vector<16x32xf32>
    %c0_5 = arith.constant 0 : index
    %c0_6 = arith.constant 0 : index
    %4 = vector.load %arg4[%c0_5, %c0_6] : memref<32x32xf32, #tpu.memory_space<vmem>>, vector<32x32xf32>
    %cst = arith.constant dense<0.000000e+00> : vector<16x32xf32>
    %5 = tpu.matmul %1, %3, %cst {dimension_numbers = #tpu.dot_dimension_numbers<[1], [0], [0], [1], [0, 0, 1, 1], [], []>} : vector<16x16xf32>, vector<16x32xf32>, vector<16x32xf32> -> vector<16x32xf32>
    %cst_7 = arith.constant dense<0.000000e+00> : vector<16x32xf32>
    %6 = tpu.matmul %5, %4, %cst_7 {dimension_numbers = #tpu.dot_dimension_numbers<[1], [0], [0], [1], [0, 0, 1, 1], [], []>} : vector<16x32xf32>, vector<32x32xf32>, vector<16x32xf32> -> vector<16x32xf32>
    %cst_8 = arith.constant 0.000000e+00 : f32
    %7 = vector.broadcast %cst_8 : f32 to vector<16x32xf32>
    %8 = arith.maximumf %6, %7 : vector<16x32xf32>
    %c0_9 = arith.constant 0 : index
    %c0_10 = arith.constant 0 : index
    %c0_11 = arith.constant 0 : index
    %9 = vector.load %arg5[%c0_9, %c0_10, %c0_11] : memref<1x16x32xf32, #tpu.memory_space<vmem>>, vector<1x16x32xf32>
    %10 = vector.shape_cast %9 : vector<1x16x32xf32> to vector<16x32xf32>
    %11 = vector.shape_cast %8 : vector<16x32xf32> to vector<1x16x32xf32>
    tpu.vector_store %arg5[%c0_9, %c0_10, %c0_11], %11 {strides = array<i32>} : memref<1x16x32xf32, #tpu.memory_space<vmem>>, vector<1x16x32xf32>,
    return
  }
  func.func @transform_0(%arg0: i32, %arg1: i32) -> (i32, i32, i32) {
    %c0_i32 = arith.constant 0 : i32
    %c0_i32_0 = arith.constant 0 : i32
    return %arg0, %arg1, %c0_i32 : i32, i32, i32
  }
  func.func @transform_1(%arg0: i32, %arg1: i32) -> (i32, i32, i32) {
    %c0_i32 = arith.constant 0 : i32
    %c0_i32_0 = arith.constant 0 : i32
    %c0_i32_1 = arith.constant 0 : i32
    return %arg0, %c0_i32, %c0_i32_0 : i32, i32, i32
  }
  func.func @transform_2(%arg0: i32, %arg1: i32) -> (i32, i32) {
    %c0_i32 = arith.constant 0 : i32
    %c0_i32_0 = arith.constant 0 : i32
    %c0_i32_1 = arith.constant 0 : i32
    return %c0_i32, %c0_i32_0 : i32, i32
  }
  func.func @transform_3(%arg0: i32, %arg1: i32) -> (i32, i32, i32) {
    %c0_i32 = arith.constant 0 : i32
    %c0_i32_0 = arith.constant 0 : i32
    return %arg0, %arg1, %c0_i32 : i32, i32, i32
  }
}

</mosaic_0001>

<llo_original>
// kernel: tpu_custom_call.1
$region0: #{tpu_custom_call.1}
  #allocation0 [shape = 'u32[]', space=smem, size = 0x4, offset = 0x4, fixed_abs, tag = 'smem constant byte address 0x4 - core index']
  #allocation1 [shape = 'u32[72,128]{1,0:T(1,128)}', space=vmem, size = 0x9000, scoped, tag = 'internal scratch']
  %s0 = inlined_call_operand.hbm [shape: f32[2,16,16], index: 0, kind: input, shape index: {}]
  %s1 = inlined_call_operand.hbm [shape: f32[2,16,32], index: 1, kind: input, shape index: {}]
  %s2 = inlined_call_operand.hbm [shape: f32[32,32], index: 2, kind: input, shape index: {}]
  %s3 = inlined_call_operand.hbm [shape: f32[2,16,32], index: 3, kind: output, shape index: {}]
  %s4 = sld [smem:[#allocation0]]
  $region57: #{tpu_custom_call.1} parent=0
    _
  %s6 = ssub.s32 1, %s4
  %s7 = scalar_select 0, %s6, %s4
  $region1: #{tpu_custom_call.1} parent=0
    #allocation2 [shape = 'u8[16384]{0}', space=vmem, size = 0x4000, scoped, tag = 'input window, operand 0']
    #allocation3 [shape = 's32[2]{0}', space=sflag, size = 0x8, scoped, tag = 'scoped memory for tpu_custom_call.1']
    #allocation4 [shape = 's32[2]{0}', space=sflag, size = 0x8, scoped, tag = 'scoped memory for tpu_custom_call.1']
    #allocation5 [shape = 'u8[16384]{0}', space=vmem, size = 0x4000, scoped, tag = 'input window, operand 1']
    #allocation6 [shape = 's32[2]{0}', space=sflag, size = 0x8, scoped, tag = 'scoped memory for tpu_custom_call.1']
    #allocation7 [shape = 'u8[16384]{0}', space=vmem, size = 0x4000, scoped, tag = 'input window, operand 2, single buffered']
    #allocation8 [shape = 'u8[16384]{0}', space=vmem, size = 0x4000, scoped, tag = 'output window, operand 0']
    %8 = vsyncpa [#allocation3], 0
    %s9 = scalar_lea.sflag [#allocation3], 1
    %10 = vsyncpa %s9, 0
    %11 = vsyncpa [#allocation6], 0
    %s12 = scalar_lea.sflag [#allocation6], 1
    %13 = vsyncpa %s12, 0
    %14 = vsyncpa [#allocation4], 0
    %s15 = scalar_lea.sflag [#allocation4], 1
    %16 = vsyncpa %s15, 0
    loop: start=0, step=1, limit=4
    $region2: #{tpu_custom_call.1} parent=1 // loop_pre_header
      _
    $region3: #{tpu_custom_call.1} parent=1 // loop_header
      %s18 = sphi 0, %s22
      %p19 = scmp.ge.s32.totalorder %s18, 4
      %s25 = sphi 0, %s37
      %s26 = sphi 0, %s33
      %s27 = sphi 0, %s25
      %s28 = sphi 0, %s26
      %s29 = sphi 0, %s27
      %s30 = sphi 0, %s28
      %s42 = sphi 0, %s44
      %s45 = sphi 0, %s42
      %s46 = sphi 0, %s45
      %s62 = sphi 0, %s46
      %s68 = sphi 0, %s70
      %s71 = sphi 0, %s68
      %s72 = sphi 0, %s71
      %s88 = sphi 0, %s72
      %s92 = sphi 0, %s92
      %s94 = sphi 0, %s92
      %s95 = sphi 0, %s94
      %s109 = sphi 0, %s95
      %s117 = sphi 0, %s119
      %s120 = sphi 0, %s117
      %s121 = sphi 0, %s120
      %s137 = sphi 0, %s121
    $region4: #{tpu_custom_call.1} parent=1 // loop_header_branch
      %21 = sbr.rel (%p19) target = $region8
    $region5: #{tpu_custom_call.1} parent=1 // loop_body
      %s23 = ssub.s32 %s18, 1
      %s24 = ssub.s32 %s18, 2
      %s31 = sadd.s32 1, %s26
      %p32 = scmp.ge.s32.totalorder %s31, 1
      %s33 = scalar_select %p32, 0, %s31
      %s34 = sadd.s32 1, %s25
      %s35 = scalar_select %p32, %s34, %s25
      %p36 = scmp.ge.s32.totalorder %s35, 2
      %s37 = scalar_select %p36, 0, %s35
      %s38 = ssub.s32 %s25, %s37
      %s39 = ssub.s32 %s26, %s33
      %s40 = sor.u32 %s38, %s39
      %p41 = scmp.eq.s32.totalorder %s40, 0
      %s43 = sadd.s32 %s42, 1
      %s44 = scalar_select %p41, %s42, %s43
      %p47 = pneg %p41
      %p48 = scmp.eq.s32.totalorder %s18, 1
      %p49 = por %p47, %p48
      %p50 = scmp.ne.s32.totalorder %s42, %s45
      %p51 = scmp.eq.s32.totalorder %s18, 0
      %p52 = por %p50, %p51
      %p53 = scmp.ne.s32.totalorder %s42, %s45
      %p54 = scmp.eq.s32.totalorder %s23, 1
      %p55 = por %p53, %p54
      %p56 = scmp.ne.s32.totalorder %s45, %s46
      %p57 = scmp.eq.s32.totalorder %s23, 0
      %p58 = por %p56, %p57
      %p59 = scmp.ne.s32.totalorder %s45, %s46
      %p60 = scmp.eq.s32.totalorder %s24, 1
      %p61 = por %p59, %p60
      %p63 = scmp.ne.s32.totalorder %s46, %s62
      %p64 = scmp.eq.s32.totalorder %s24, 0
      %p65 = por %p63, %p64
      %s66 = ssub.s32 %s25, %s37
      %p67 = scmp.eq.s32.totalorder %s66, 0
      %s69 = sadd.s32 %s68, 1
      %s70 = scalar_select %p67, %s68, %s69
      %p73 = pneg %p67
      %p74 = scmp.eq.s32.totalorder %s18, 1
      %p75 = por %p73, %p74
      %p76 = scmp.ne.s32.totalorder %s68, %s71
      %p77 = scmp.eq.s32.totalorder %s18, 0
      %p78 = por %p76, %p77
      %p79 = scmp.ne.s32.totalorder %s68, %s71
      %p80 = scmp.eq.s32.totalorder %s23, 1
      %p81 = por %p79, %p80
      %p82 = scmp.ne.s32.totalorder %s71, %s72
      %p83 = scmp.eq.s32.totalorder %s23, 0
      %p84 = por %p82, %p83
      %p85 = scmp.ne.s32.totalorder %s71, %s72
      %p86 = scmp.eq.s32.totalorder %s24, 1
      %p87 = por %p85, %p86
      %p89 = scmp.ne.s32.totalorder %s72, %s88
      %p90 = scmp.eq.s32.totalorder %s24, 0
      %p91 = por %p89, %p90
      %s93 = sadd.s32 %s92, 1
      %p96 = scmp.eq.s32.totalorder %s18, 1
      %p97 = scmp.ne.s32.totalorder %s92, %s94
      %p98 = scmp.eq.s32.totalorder %s18, 0
      %p99 = por %p97, %p98
      %p100 = scmp.ne.s32.totalorder %s92, %s94
      %p101 = scmp.eq.s32.totalorder %s23, 1
      %p102 = por %p100, %p101
      %p103 = scmp.ne.s32.totalorder %s94, %s95
      %p104 = scmp.eq.s32.totalorder %s23, 0
      %p105 = por %p103, %p104
      %p106 = scmp.ne.s32.totalorder %s94, %s95
      %p107 = scmp.eq.s32.totalorder %s24, 1
      %p108 = por %p106, %p107
      %p110 = scmp.ne.s32.totalorder %s95, %s109
      %p111 = scmp.eq.s32.totalorder %s24, 0
      %p112 = por %p110, %p111
      %s113 = ssub.s32 %s25, %s37
      %s114 = ssub.s32 %s26, %s33
      %s115 = sor.u32 %s113, %s114
      %p116 = scmp.eq.s32.totalorder %s115, 0
      %s118 = sadd.s32 %s117, 1
      %s119 = scalar_select %p116, %s117, %s118
      %p122 = pneg %p116
      %p123 = scmp.eq.s32.totalorder %s18, 1
      %p124 = por %p122, %p123
      %p125 = scmp.ne.s32.totalorder %s117, %s120
      %p126 = scmp.eq.s32.totalorder %s18, 0
      %p127 = por %p125, %p126
      %p128 = scmp.ne.s32.totalorder %s117, %s120
      %p129 = scmp.eq.s32.totalorder %s23, 1
      %p130 = por %p128, %p129
      %p131 = scmp.ne.s32.totalorder %s120, %s121
      %p132 = scmp.eq.s32.totalorder %s23, 0
      %p133 = por %p131, %p132
      %p134 = scmp.ne.s32.totalorder %s120, %s121
      %p135 = scmp.eq.s32.totalorder %s24, 1
      %p136 = por %p134, %p135
      %p138 = scmp.ne.s32.totalorder %s121, %s137
      %p139 = scmp.eq.s32.totalorder %s24, 0
      %p140 = por %p138, %p139
      %p141 = scmp.le.s32.totalorder 1, %s18
      %p142 = scmp.lt.s32.totalorder %s18, 3
      %p143 = pnand %p141, %p142
      %p144 = pneg %p143
      // Predicated region
      $region9: #{tpu_custom_call.1} parent=5 // pred_check
        _
      $region10: #{tpu_custom_call.1} parent=5 // pred_check_branch
        %146 = sbr.rel (%p143) target = $region12
      $region11: #{tpu_custom_call.1} parent=5 // pred_region
        %s147 = ssub.s32 %s18, 1
        // Predicated region
        $region13: #{tpu_custom_call.1} parent=11 // pred_check
          %p148 = pneg %p105
        $region14: #{tpu_custom_call.1} parent=11 // pred_check_branch
          %150 = sbr.rel (%p148) target = $region16
        $region15: #{tpu_custom_call.1} parent=11 // pred_region
          %152 = vsyncadd [#allocation6], 0
          %s153 = sshll.u32 %s2, 4
          %s154 = int_to_ptr.hbm [resolvable:$true] %s153
          %s155 = sshll.u32 [#allocation7], 4
          %s156 = int_to_ptr.vmem [resolvable:$true] %s155
          %161 = dma.hbm_to_vmem [thread:$0]  %s154, 512, %s156, [#allocation6], 128, 128, 8
        $region16: #{tpu_custom_call.1} parent=11 // pred_fallthru
          _
      $region12: #{tpu_custom_call.1} parent=5 // pred_fallthru
        _
      %p162 = scmp.lt.s32.totalorder %s18, 2
      // Predicated region
      $region17: #{tpu_custom_call.1} parent=5 // pred_check
        %p163 = pneg %p162
      $region18: #{tpu_custom_call.1} parent=5 // pred_check_branch
        %165 = sbr.rel (%p163) target = $region20
      $region19: #{tpu_custom_call.1} parent=5 // pred_region
        // Predicated region
        $region21: #{tpu_custom_call.1} parent=19 // pred_check
          %p166 = pneg %p52
        $region22: #{tpu_custom_call.1} parent=19 // pred_check_branch
          %168 = sbr.rel (%p166) target = $region24
        $region23: #{tpu_custom_call.1} parent=19 // pred_region
          %s169 = sand.u32 %s42, 1
          %s170 = scalar_lea.sflag [#allocation3], %s169
          %s171 = sand.u32 %s42, 1
          %s172 = smul.addr %s171, 16
          %s173 = scalar_lea.vmem [#allocation2], %s172
          %s174 = smul.u32 2, %s26
          %176 = vsyncadd %s170, 0
          %s177 = smul.addr %s25, 2
          %s178 = sadd.s32 %s174, %s177
          %s179 = smul.addr %s178, 8
          %s180 = scalar_lea.hbm %s0, %s179
          %s181 = sshll.u32 %s180, 4
          %s182 = int_to_ptr.hbm [resolvable:$true] %s181
          %s183 = sshll.u32 %s173, 4
          %s184 = int_to_ptr.vmem [resolvable:$true] %s183
          %189 = dma.hbm_to_vmem [thread:$0]  %s182, 256, %s184, %s170, 128, 128, 8
        $region24: #{tpu_custom_call.1} parent=19 // pred_fallthru
          _
        // Predicated region
        $region25: #{tpu_custom_call.1} parent=19 // pred_check
          %p190 = pneg %p78
        $region26: #{tpu_custom_call.1} parent=19 // pred_check_branch
          %192 = sbr.rel (%p190) target = $region28
        $region27: #{tpu_custom_call.1} parent=19 // pred_region
          %s193 = sand.u32 %s18, 1
          %s194 = scalar_lea.sflag [#allocation6], %s193
          %s195 = sand.u32 %s68, 1
          %s196 = smul.addr %s195, 16
          %s197 = scalar_lea.vmem [#allocation5], %s196
          %199 = vsyncadd %s194, 0
          %s200 = smul.addr %s25, 2
          %s201 = smul.addr %s200, 8
          %s202 = scalar_lea.hbm %s1, %s201
          %s203 = sshll.u32 %s202, 4
          %s204 = int_to_ptr.hbm [resolvable:$true] %s203
          %s205 = sshll.u32 %s197, 4
          %s206 = int_to_ptr.vmem [resolvable:$true] %s205
          %211 = dma.hbm_to_vmem [thread:$0]  %s204, 256, %s206, %s194, 128, 128, 8
        $region28: #{tpu_custom_call.1} parent=19 // pred_fallthru
          _
      $region20: #{tpu_custom_call.1} parent=5 // pred_fallthru
        _
      %p212 = scmp.le.s32.totalorder 1, %s18
      %p213 = scmp.lt.s32.totalorder %s18, 3
      %p214 = pnand %p212, %p213
      %p215 = pneg %p214
      // Predicated region
      $region29: #{tpu_custom_call.1} parent=5 // pred_check
        _
      $region30: #{tpu_custom_call.1} parent=5 // pred_check_branch
        %217 = sbr.rel (%p214) target = $region32
      $region31: #{tpu_custom_call.1} parent=5 // pred_region
        %s218 = ssub.s32 %s18, 1
        %s219 = sand.u32 %s45, 1
        %s220 = scalar_lea.sflag [#allocation3], %s219
        %s221 = sand.u32 %s45, 1
        %s222 = smul.addr %s221, 16
        %s223 = scalar_lea.vmem [#allocation2], %s222
        // Predicated region
        $region33: #{tpu_custom_call.1} parent=31 // pred_check
          %p224 = pneg %p58
        $region34: #{tpu_custom_call.1} parent=31 // pred_check_branch
          %226 = sbr.rel (%p224) target = $region36
        $region35: #{tpu_custom_call.1} parent=31 // pred_region
          %228 = dma.done %s220, 256
        $region36: #{tpu_custom_call.1} parent=31 // pred_fallthru
          _
        %s229 = sand.u32 %s23, 1
        %s230 = scalar_lea.sflag [#allocation6], %s229
        %s231 = sand.u32 %s71, 1
        %s232 = smul.addr %s231, 16
        %s233 = scalar_lea.vmem [#allocation5], %s232
        // Predicated region
        $region37: #{tpu_custom_call.1} parent=31 // pred_check
          %p234 = pneg %p84
        $region38: #{tpu_custom_call.1} parent=31 // pred_check_branch
          %236 = sbr.rel (%p234) target = $region40
        $region39: #{tpu_custom_call.1} parent=31 // pred_region
          %238 = dma.done %s230, 256
        $region40: #{tpu_custom_call.1} parent=31 // pred_fallthru
          _
        // Predicated region
        $region41: #{tpu_custom_call.1} parent=31 // pred_check
          %p239 = pneg %p105
        $region42: #{tpu_custom_call.1} parent=31 // pred_check_branch
          %241 = sbr.rel (%p239) target = $region44
        $region43: #{tpu_custom_call.1} parent=31 // pred_region
          %243 = dma.done [#allocation6], 512
        $region44: #{tpu_custom_call.1} parent=31 // pred_fallthru
          _
        %s244 = sand.u32 %s45, 1
        %s245 = scalar_lea.sflag [#allocation3], %s244
        %s246 = sand.u32 %s45, 1
        %s247 = smul.addr %s246, 16
        %s248 = scalar_lea.vmem [#allocation2], %s247
        %p249 = pneg %p58
        %p250 = pneg %p55
        %s251 = sand.u32 %s23, 1
        %s252 = scalar_lea.sflag [#allocation6], %s251
        %s253 = sand.u32 %s71, 1
        %s254 = smul.addr %s253, 16
        %s255 = scalar_lea.vmem [#allocation5], %s254
        %p256 = pneg %p84
        %p257 = pneg %p81
        %p258 = pneg %p105
        %p259 = pneg %p102
        %p260 = pneg %p133
        %p261 = pneg %p130
        %s262 = sand.u32 %s120, 1
        %s263 = scalar_lea.sflag [#allocation4], %s262
        %s264 = sand.u32 %s120, 1
        %s265 = smul.addr %s264, 16
        %s266 = scalar_lea.vmem [#allocation8], %s265
        %s267 = smul.u32 2, %s28
        %s268 = smul.u32 2, %s28
        %v269 = vld [vmem:[%s223] sm:$0xff]
        %v270 = vld [vmem:[%s223 + $0x8] sm:$0xff]
        %v271 = vld [vmem:[%s233] sm:$0xff]
        %v272 = vld [vmem:[%s233 + $0x8] sm:$0xff]
        %v273 = vld [vmem:[#allocation7] sm:$0xff]
        %v274 = vld [vmem:[#allocation7 + $0x8] sm:$0xff]
        %v275 = vld [vmem:[#allocation7 + $0x10] sm:$0xff]
        %v276 = vld [vmem:[#allocation7 + $0x18] sm:$0xff]
        %vm277 = vcmask 130048
        %v279 = vsel %vm277, %v269, 0
        %v282 = vsel %vm277, %v270, 0
        %284 = vmatpush.msra.mxu0 0.0
        %285 = vmatpush.msra.mxu0 0.0
        %286 = vmatpush.msra.mxu0 0.0
        %287 = vmatpush.msra.mxu0 0.0
        %288 = vmatpush.msra.mxu0 0.0
        %289 = vmatpush.msra.mxu0 0.0
        %290 = vmatpush.msra.mxu0 0.0
        %291 = vmatpush.msra.mxu0 0.0
        %292 = vmatpush.msra.mxu0 0.0
        %293 = vmatpush.msra.mxu0 0.0
        %294 = vmatpush.msra.mxu0 0.0
        %295 = vmatpush.msra.mxu0 0.0
        %296 = vmatpush.msra.mxu0 0.0
        %297 = vmatpush.msra.mxu0 0.0
        %298 = vmatpush.msra.mxu0 %v272
        %299 = vmatpush.msra.mxu0 %v271
        %300 = vmatmul.f32.gmra.mxu0 %v279
        %v301 = vpop.f32.mrf.mxu0
        %v302 = vadd.f32 0.0, %v301
        %303 = vmatmul.f32.gmra.mxu0 %v282
        %v304 = vpop.f32.mrf.mxu0
        %v305 = vadd.f32 0.0, %v304
        %306 = vdwg.mxu0
        %vm307 = vcmask 261120
        %v309 = vsel %vm307, %v302, 0
        %v312 = vsel %vm307, %v305, 0
        %314 = vmatpush.msra.mxu0 0.0
        %315 = vmatpush.msra.mxu0 0.0
        %316 = vmatpush.msra.mxu0 0.0
        %317 = vmatpush.msra.mxu0 0.0
        %318 = vmatpush.msra.mxu0 0.0
        %319 = vmatpush.msra.mxu0 0.0
        %320 = vmatpush.msra.mxu0 0.0
        %321 = vmatpush.msra.mxu0 0.0
        %322 = vmatpush.msra.mxu0 0.0
        %323 = vmatpush.msra.mxu0 0.0
        %324 = vmatpush.msra.mxu0 0.0
        %325 = vmatpush.msra.mxu0 0.0
        %326 = vmatpush.msra.mxu0 %v276
        %327 = vmatpush.msra.mxu0 %v275
        %328 = vmatpush.msra.mxu0 %v274
        %329 = vmatpush.msra.mxu0 %v273
        %330 = vmatmul.f32.gmra.mxu0 %v309
        %v331 = vpop.f32.mrf.mxu0
        %v332 = vadd.f32 0.0, %v331
        %333 = vmatmul.f32.gmra.mxu0 %v312
        %v334 = vpop.f32.mrf.mxu0
        %v335 = vadd.f32 0.0, %v334
        %336 = vdwg.mxu0
        %v337 = vmax.f32 %v332, 0.0
        %v338 = vmax.f32 %v335, 0.0
        %339 = vst.msk [vmem:[%s266] sm:$0xff] %vm307, %v337
        %340 = vst.msk [vmem:[%s266 + $0x8] sm:$0xff] %vm307, %v338
        %s341 = sand.u32 %s120, 1
        %s342 = scalar_lea.sflag [#allocation4], %s341
        %s343 = sand.u32 %s120, 1
        %s344 = smul.addr %s343, 16
        %s345 = scalar_lea.vmem [#allocation8], %s344
        // Predicated region
        $region45: #{tpu_custom_call.1} parent=31 // pred_check
          %p346 = pneg %p130
        $region46: #{tpu_custom_call.1} parent=31 // pred_check_branch
          %348 = sbr.rel (%p346) target = $region48
        $region47: #{tpu_custom_call.1} parent=31 // pred_region
          %s349 = smul.u32 2, %s28
          %351 = vsyncadd %s342, 0
          %s352 = smul.addr %s27, 2
          %s353 = sadd.s32 %s349, %s352
          %s354 = smul.addr %s353, 8
          %s355 = scalar_lea.hbm %s3, %s354
          %s356 = sshll.u32 %s345, 4
          %s357 = int_to_ptr.vmem [resolvable:$true] %s356
          %s358 = sshll.u32 %s355, 4
          %s359 = int_to_ptr.hbm [resolvable:$true] %s358
          %364 = dma.vmem_to_hbm [thread:$0]  %s357, 256, %s359, %s342, 128, 128, 8
        $region48: #{tpu_custom_call.1} parent=31 // pred_fallthru
          _
      $region32: #{tpu_custom_call.1} parent=5 // pred_fallthru
        _
      %p365 = scmp.le.s32.totalorder 2, %s18
      // Predicated region
      $region49: #{tpu_custom_call.1} parent=5 // pred_check
        %p366 = pneg %p365
      $region50: #{tpu_custom_call.1} parent=5 // pred_check_branch
        %368 = sbr.rel (%p366) target = $region52
      $region51: #{tpu_custom_call.1} parent=5 // pred_region
        %s369 = ssub.s32 %s18, 2
        // Predicated region
        $region53: #{tpu_custom_call.1} parent=51 // pred_check
          %p370 = pneg %p136
        $region54: #{tpu_custom_call.1} parent=51 // pred_check_branch
          %372 = sbr.rel (%p370) target = $region56
        $region55: #{tpu_custom_call.1} parent=51 // pred_region
          %s373 = sand.u32 %s121, 1
          %s374 = scalar_lea.sflag [#allocation4], %s373
          %s375 = sand.u32 %s121, 1
          %s376 = smul.addr %s375, 16
          %s377 = scalar_lea.vmem [#allocation8], %s376
          %379 = dma.done %s374, 256
        $region56: #{tpu_custom_call.1} parent=51 // pred_fallthru
          _
      $region52: #{tpu_custom_call.1} parent=5 // pred_fallthru
        _
    $region6: #{tpu_custom_call.1} parent=1 // loop_footer
      %s22 = sadd.s32 1, %s18
    $region7: #{tpu_custom_call.1} parent=1 // loop_footer_branch
      %17 = sbr.rel target = $region3
    $region8: #{tpu_custom_call.1} parent=1 // loop_exit
      _
    %380 = vsyncpa [#allocation3], 1
    %s381 = scalar_lea.sflag [#allocation3], 1
    %382 = vsyncpa %s381, 1
    %383 = vsyncpa [#allocation6], 1
    %s384 = scalar_lea.sflag [#allocation6], 1
    %385 = vsyncpa %s384, 1
    %386 = vsyncpa [#allocation4], 1
    %s387 = scalar_lea.sflag [#allocation4], 1
    %388 = vsyncpa %s387, 1

</llo_original>
